<compile_context>
chip_gen: v6e
topology: v6e:2x2x1
jax: 0.10.0
libtpu: 0.0.40
codegen_flags: <defaults>
</compile_context>

<pallas_src>
import functools

import numpy as np
import jax
import jax.numpy as jnp
from jax.experimental import pallas as pl
from jax.experimental.pallas import tpu as pltpu


def _round_up(x, m):
    return (x + m - 1) // m * m


def _l2norm_kernel(x_ref, o_ref):
    """Row-wise L2 normalization, matching torch: x / sqrt(sum(x^2) + 1e-10)."""
    x = x_ref[...].astype(jnp.float32)
    normp = jnp.sum(x * x, axis=1, keepdims=True) + 1e-10
    o_ref[...] = x * jax.lax.rsqrt(normp)


def _entropy_kernel(bi_ref, bj_ref, xr_ref, xc_ref, o_ref, *,
                    my_u, my_l, eps, fuse_log):
    """One upper-triangular (tile x tile) block of the sim/entropy sum."""
    t = pl.program_id(0)
    i = bi_ref[t]          # row-block index (scalar from SMEM)
    j = bj_ref[t]          # col-block index (scalar from SMEM)

    xr = xr_ref[...]       # (tile, Dp) f32, already L2-normalized
    xc = xc_ref[...]       # (tile, Dp) f32, already L2-normalized

    # NT matmul straight on the MXU (no explicit transpose of xc).
    sim = jax.lax.dot_general(
        xr, xc,
        dimension_numbers=(((1,), (1,)), ((), ())),
        preferred_element_type=jnp.float32)            # (tile, tile)

    pos_b = sim > my_u
    neg_b = sim < my_l

    if fuse_log:
        # Masks are disjoint (my_u >= my_l): one EUP log per element.
        arg = jnp.where(pos_b,
                        jnp.clip(sim, eps, 1.0),
                        jnp.clip(1.0 - sim, eps, 1.0))
        entropy = jnp.where(pos_b | neg_b, -jnp.log(arg), 0.0)
    else:
        entropy = (-jnp.log(jnp.clip(sim, eps, 1.0)) * pos_b.astype(jnp.float32)
                   - jnp.log(jnp.clip(1.0 - sim, eps, 1.0)) * neg_b.astype(jnp.float32))

    # Padded rows are all-zero -> normalized to zero -> sim == 0 exactly ->
    # pos mask false and -log(clip(1 - 0)) == 0, so no padding mask is needed.

    # Symmetry weighting: off-diagonal blocks count twice.
    w = jnp.where(i == j, jnp.float32(1.0), jnp.float32(2.0))

    # Lane-dense (1, 8, 128) partial-sum slab; one unmasked vector store.
    o_ref[...] = jnp.zeros_like(o_ref) + w * jnp.sum(entropy)


def loss_func(label_feat, my_u=0.9, my_l=0.5, eps=1e-7, block_n=None):
    """Pallas implementation of LossFunc.forward. Returns a scalar f32."""
    n, d = label_feat.shape

    if block_n is None:
        tile = 256 if n >= 256 else _round_up(n, 8)
    else:
        assert block_n % 8 == 0, "block_n must be a multiple of 8"
        tile = block_n

    n_pad = _round_up(n, tile)
    d_pad = _round_up(d, 128)
    gi = n_pad // tile

    x = label_feat
    if (n_pad, d_pad) != (n, d):
        # Zero padding does not change norms or dot products; padded rows
        # contribute exactly zero entropy (see kernel comment).
        x = jnp.pad(x, ((0, n_pad - n), (0, d_pad - d)))

    # ---- Pass 1: per-row L2 normalization (each row touched exactly once).
    xn = pl.pallas_call(
        _l2norm_kernel,
        out_shape=jax.ShapeDtypeStruct((n_pad, d_pad), jnp.float32),
        grid=(gi,),
        in_specs=[pl.BlockSpec((tile, d_pad), lambda i: (i, 0))],
        out_specs=pl.BlockSpec((tile, d_pad), lambda i: (i, 0)),
        compiler_params=pltpu.CompilerParams(
            dimension_semantics=("parallel",),
            vmem_limit_bytes=48 * 1024 * 1024,
        ),
    )(x)

    # ---- Pass 2: triangular block sweep over the (never-materialized) sim
    # matrix.  Enumerate (i, j >= i) row-major so the row block stays resident.
    bi = np.concatenate([np.full(gi - i, i, dtype=np.int32) for i in range(gi)])
    bj = np.concatenate([np.arange(i, gi, dtype=np.int32) for i in range(gi)])
    num_blocks = int(bi.shape[0])   # gi * (gi + 1) / 2

    kernel = functools.partial(
        _entropy_kernel,
        my_u=float(my_u), my_l=float(my_l), eps=float(eps),
        fuse_log=(float(my_u) >= float(my_l)),
    )

    partials = pl.pallas_call(
        kernel,
        out_shape=jax.ShapeDtypeStruct((num_blocks, 8, 128), jnp.float32),
        grid_spec=pltpu.PrefetchScalarGridSpec(
            num_scalar_prefetch=2,
            grid=(num_blocks,),
            in_specs=[
                pl.BlockSpec((tile, d_pad), lambda t, bi_r, bj_r: (bi_r[t], 0)),
                pl.BlockSpec((tile, d_pad), lambda t, bi_r, bj_r: (bj_r[t], 0)),
            ],
            out_specs=pl.BlockSpec((1, 8, 128), lambda t, bi_r, bj_r: (t, 0, 0)),
        ),
        compiler_params=pltpu.CompilerParams(
            dimension_semantics=("parallel",),
            vmem_limit_bytes=48 * 1024 * 1024,
        ),
    )(jnp.asarray(bi), jnp.asarray(bj), xn, xn)

    # Every element of each (8, 128) slab holds that block's weighted partial
    # sum; mean(pos_entropy) + mean(neg_entropy) == (sum_pos + sum_neg) / N^2.
    total = jnp.sum(partials[:, 0, 0])
    return total / jnp.float32(n * n)


def _loss_ref(label_feat, my_u=0.9, my_l=0.5, eps=1e-7):
    """Pure-JAX reference mirroring the PyTorch module, for sanity checking."""
    x = label_feat.astype(jnp.float32)
    normp = jnp.sum(x * x, axis=1, keepdims=True) + 1e-10
    xn = x / jnp.sqrt(normp)
    sim = xn @ xn.T
    pos_loc = (sim > my_u).astype(jnp.float32)
    neg_loc = (sim < my_l).astype(jnp.float32)
    pos_entropy = -jnp.log(jnp.clip(sim, eps, 1.0)) * pos_loc
    neg_entropy = -jnp.log(jnp.clip(1.0 - sim, eps, 1.0)) * neg_loc
    return jnp.mean(pos_entropy) + jnp.mean(neg_entropy)


if __name__ == "__main__":
    # Deterministic hyperparameters (module __init__ args).
    MY_U, MY_L, EPS = 0.9, 0.5, 1e-7

    # Test 1: single block, D padded to 128 lanes.
    x1 = jax.random.normal(jax.random.PRNGKey(0), (8, 32), dtype=jnp.float32)
    out1 = loss_func(x1, MY_U, MY_L, EPS)
    jax.block_until_ready(out1)
    ref1 = _loss_ref(x1, MY_U, MY_L, EPS)
    jax.block_until_ready(ref1)
    assert jnp.allclose(out1, ref1, rtol=1e-5, atol=1e-5), (out1, ref1)

    # Test 2: multi-block triangular grid, 2x off-diagonal weighting and
    # zero-padded rows (N=20 -> 24 with 8-row blocks, 6 upper-tri blocks).
    x2 = jax.random.normal(jax.random.PRNGKey(1), (20, 40), dtype=jnp.float32)
    out2 = loss_func(x2, MY_U, MY_L, EPS, block_n=8)
    jax.block_until_ready(out2)
    ref2 = _loss_ref(x2, MY_U, MY_L, EPS)
    jax.block_until_ready(ref2)
    assert jnp.allclose(out2, ref2, rtol=1e-5, atol=1e-5), (out2, ref2)

    # Test 3: default 256-row tiles, 2x2 block grid (3 upper-tri blocks).
    x3 = jax.random.normal(jax.random.PRNGKey(2), (300, 64), dtype=jnp.float32)
    out3 = loss_func(x3, MY_U, MY_L, EPS)
    jax.block_until_ready(out3)
    ref3 = _loss_ref(x3, MY_U, MY_L, EPS)
    jax.block_until_ready(ref3)
    assert jnp.allclose(out3, ref3, rtol=1e-5, atol=2e-5), (out3, ref3)

    print("KERNEL_OK")
</pallas_src>

<mosaic_0001>
module attributes {stable_mosaic.version = 11 : i64} {
  func.func @_l2norm_kernel(%arg0: i32, %arg1: memref<8x128xf32, #tpu.memory_space<vmem>>, %arg2: memref<8x128xf32, #tpu.memory_space<vmem>>) attributes {dimension_semantics = [#tpu.dimension_semantics<parallel>], iteration_bounds = array<i64: 1>, scalar_prefetch = 0 : i64, scratch_operands = 0 : i64, tpu.core_type = #tpu.core_type<tc>, window_params = [{transform_indices = @transform_0, window_bounds = array<i64: 8, 128>}, {transform_indices = @transform_1, window_bounds = array<i64: 8, 128>}]} {
    %c0 = arith.constant 0 : index
    %c0_0 = arith.constant 0 : index
    %0 = vector.load %arg1[%c0, %c0_0] : memref<8x128xf32, #tpu.memory_space<vmem>>, vector<8x128xf32>
    %1 = arith.mulf %0, %0 : vector<8x128xf32>
    %cst = arith.constant dense<0.000000e+00> : vector<8xf32>
    %2 = vector.multi_reduction <add>, %1, %cst [1] : vector<8x128xf32> to vector<8xf32>
    %3 = vector.shape_cast %2 : vector<8xf32> to vector<8x1xf32>
    %cst_1 = arith.constant 1.000000e-10 : f32
    %4 = vector.broadcast %cst_1 : f32 to vector<8x1xf32>
    %5 = arith.addf %3, %4 : vector<8x1xf32>
    %6 = math.rsqrt %5 : vector<8x1xf32>
    %7 = vector.broadcast %6 : vector<8x1xf32> to vector<8x128xf32>
    %8 = arith.mulf %0, %7 : vector<8x128xf32>
    %c0_2 = arith.constant 0 : index
    %c0_3 = arith.constant 0 : index
    %9 = vector.load %arg2[%c0_2, %c0_3] : memref<8x128xf32, #tpu.memory_space<vmem>>, vector<8x128xf32>
    tpu.vector_store %arg2[%c0_2, %c0_3], %8 {strides = array<i32>} : memref<8x128xf32, #tpu.memory_space<vmem>>, vector<8x128xf32>,
    return
  }
  func.func @transform_0(%arg0: i32) -> (i32, i32) {
    %c0_i32 = arith.constant 0 : i32
    %c0_i32_0 = arith.constant 0 : i32
    return %arg0, %c0_i32 : i32, i32
  }
  func.func @transform_1(%arg0: i32) -> (i32, i32) {
    %c0_i32 = arith.constant 0 : i32
    %c0_i32_0 = arith.constant 0 : i32
    return %arg0, %c0_i32 : i32, i32
  }
}

</mosaic_0001>

<llo_original>
// kernel: tpu_custom_call.1
$region0: #{tpu_custom_call.1}
  #allocation0 [shape = 'u32[]', space=smem, size = 0x4, offset = 0x4, fixed_abs, tag = 'smem constant byte address 0x4 - core index']
  #allocation1 [shape = 'u32[144,128]{1,0:T(1,128)}', space=vmem, size = 0x12000, scoped, tag = 'internal scratch']
  %s0 = inlined_call_operand.hbm [shape: f32[8,128], index: 0, kind: input, shape index: {}]
  %s1 = inlined_call_operand.hbm [shape: f32[8,128], index: 1, kind: output, shape index: {}]
  %s2 = sld [smem:[#allocation0]]
  $region18: #{tpu_custom_call.1} parent=0
    _
  %s4 = ssub.s32 1, %s2
  %s5 = scalar_select 0, %s4, %s2
  $region1: #{tpu_custom_call.1} parent=0
    #allocation2 [shape = 'u8[4096]{0}', space=vmem, size = 0x1000, scoped, tag = 'input window, operand 0, single buffered']
    #allocation3 [shape = 's32[1]{0}', space=sflag, size = 0x4, scoped, tag = 'scoped memory for tpu_custom_call.1']
    #allocation4 [shape = 's32[1]{0}', space=sflag, size = 0x4, scoped, tag = 'scoped memory for tpu_custom_call.1']
    #allocation5 [shape = 'u8[4096]{0}', space=vmem, size = 0x1000, scoped, tag = 'output window, operand 0, single buffered']
    %6 = vsyncpa [#allocation3], 0
    %7 = vsyncpa [#allocation4], 0
    // Predicated region
    $region2: #{tpu_custom_call.1} parent=1 // pred_check
      _
    $region3: #{tpu_custom_call.1} parent=1 // pred_check_branch
      %9 = sbr.rel (0) target = $region5
    $region4: #{tpu_custom_call.1} parent=1 // pred_region
      %s11 = ssub.s32 128, 128
      %12 = vsyncadd [#allocation3], %s11
      %s14 = sshll.u32 [#allocation2], 4
      %s15 = int_to_ptr.vmem [resolvable:$true] %s14
      %17 = dma.hbm_to_vmem [thread:$0]  %s0, 128, %s15, [#allocation3]
    $region5: #{tpu_custom_call.1} parent=1 // pred_fallthru
      _
    // Predicated region
    $region6: #{tpu_custom_call.1} parent=1 // pred_check
      _
    $region7: #{tpu_custom_call.1} parent=1 // pred_check_branch
      %19 = sbr.rel (0) target = $region9
    $region8: #{tpu_custom_call.1} parent=1 // pred_region
      %20 = dma.done [#allocation3], 128
    $region9: #{tpu_custom_call.1} parent=1 // pred_fallthru
      _
    %v21 = vld [vmem:[#allocation2] sm:$0xff]
    %v22 = vmul.f32 %v21, %v21
    %23 = vadd.xlane.f32.xlu0 %v22
    %v24 = vpop.xlane.xlu0 %23
    %v25 = vadd.f32 %v24, 1e-10
    %v26 = vrsqrt.pop %v25
    %v27 = vmul.f32 %v21, %v26
    %28 = vst [vmem:[#allocation5] sm:$0xff] %v27
    // Predicated region
    $region10: #{tpu_custom_call.1} parent=1 // pred_check
      _
    $region11: #{tpu_custom_call.1} parent=1 // pred_check_branch
      %30 = sbr.rel (0) target = $region13
    $region12: #{tpu_custom_call.1} parent=1 // pred_region
      %s32 = ssub.s32 128, 128
      %33 = vsyncadd [#allocation4], %s32
      %s35 = sshll.u32 [#allocation5], 4
      %s36 = int_to_ptr.vmem [resolvable:$true] %s35
      %38 = dma.vmem_to_hbm [thread:$0]  %s36, 128, %s1, [#allocation4]
    $region13: #{tpu_custom_call.1} parent=1 // pred_fallthru
      _
    // Predicated region
    $region14: #{tpu_custom_call.1} parent=1 // pred_check
      _
    $region15: #{tpu_custom_call.1} parent=1 // pred_check_branch
      %40 = sbr.rel (0) target = $region17
    $region16: #{tpu_custom_call.1} parent=1 // pred_region
      %41 = dma.done [#allocation4], 128
    $region17: #{tpu_custom_call.1} parent=1 // pred_fallthru
      _
    %42 = vsyncpa [#allocation3], 1
    %43 = vsyncpa [#allocation4], 1

</llo_original>
